<compile_context>
chip_gen: v5e
topology: v5e:2x2
jax: 0.10.0
libtpu: 0.0.40
codegen_flags: <defaults>
</compile_context>

<pallas_src>
import functools

import jax
import jax.numpy as jnp
from jax.experimental import pallas as pl
from jax.experimental.pallas import tpu as pltpu

BN_EPS = 1e-5


def _fused_conv_bn_relu_kernel(x_ref, w_ref, g_ref, b_ref, o_ref,
                               y_ref, xi_ref, xp_ref,
                               *, K, C_in, C_in_pad, L_out):
    i = pl.program_id(0)
    NB, _, L = x_ref.shape            # samples per step, true length
    N, C_out, L_lane = y_ref.shape    # full batch, channels, lane-padded length

    # One-time init: zero the staging buffers so their lane / sublane padding
    # is deterministic (VMEM scratch is uninitialized; the padded weight
    # columns are zero, but 0 * NaN would still poison the matmul).
    @pl.when(i == 0)
    def _():
        xi_ref[...] = jnp.zeros_like(xi_ref)
        xp_ref[...] = jnp.zeros_like(xp_ref)

    # Conv for the NB samples of this step: build a sublane/lane-aligned
    # im2col block from K lane rotations (XLU slot) and run ONE MXU
    # contraction per sample.  (With L < 128 lanes, concatenating samples
    # along lanes would be a misaligned store; the matmuls are tiny anyway.)
    for b in range(NB):                                    # static, small
        xp_ref[:, 0:L] = x_ref[b]                          # on-chip lane pad
        xp = xp_ref[...]                                   # (C_in, L_lane)
        xi_ref[pl.ds(0, C_in), :] = xp
        for k in range(1, K):
            # Left shift by k via lane rotation; wrap-around columns land at
            # positions >= L_out and are excluded from stats / output below.
            xi_ref[pl.ds(k * C_in_pad, C_in), :] = pltpu.roll(
                xp, shift=L_lane - k, axis=1)
        y = jnp.dot(w_ref[...], xi_ref[...],
                    preferred_element_type=jnp.float32)    # (C_out, L_lane)
        y_ref[pl.ds(i * NB + b, 1)] = y[None]

    # Finalize at the last grid step: training-mode BatchNorm statistics over
    # the VMEM-resident conv result, fold into scale/shift, ReLU, single write.
    @pl.when(i == pl.num_programs(0) - 1)
    def _():
        yv = y_ref[...]                                    # (N, C_out, L_lane)
        lane = jax.lax.broadcasted_iota(jnp.int32, yv.shape, 2)
        valid = lane < L_out                               # static mask
        inv_cnt = 1.0 / float(N * L_out)

        s = jnp.sum(jnp.where(valid, yv, 0.0), axis=2, keepdims=True)
        mean = jnp.sum(s, axis=0, keepdims=True) * inv_cnt        # (1,C_out,1)
        c = jnp.where(valid, yv - mean, 0.0)                      # two-pass var
        v = jnp.sum(c * c, axis=2, keepdims=True)
        var = jnp.sum(v, axis=0, keepdims=True) * inv_cnt         # (1,C_out,1)

        scale = g_ref[...][None] * jax.lax.rsqrt(var + BN_EPS)    # (1,C_out,1)
        shift = b_ref[...][None] - mean * scale
        out = jnp.maximum(yv * scale + shift, 0.0)
        o_ref[...] = out[:, :, :L_out].astype(o_ref.dtype)


def _round_up(x, m):
    return (x + m - 1) // m * m


def _pick_nb(n, c_in, l, itemsize=4, budget_bytes=2 << 20):
    """Samples per grid step: as many as fit a modest (double-buffered) budget."""
    per_sample = 2 * c_in * l * itemsize
    nb = max(1, min(n, budget_bytes // max(per_sample, 1)))
    while n % nb:
        nb -= 1
    return nb


@jax.jit
def basic_conv1d(x, w, gamma, beta):
    """x: (N, C_in, L), w: (C_out, C_in, K), gamma/beta: (C_out,).

    Conv1d(stride=1, no padding, bias=False) -> BatchNorm1d(train) -> ReLU.
    """
    N, C_in, L = x.shape
    C_out, _, K = w.shape
    L_out = L - K + 1
    L_lane = _round_up(L, 128)              # on-chip lane-aligned length
    C_in_pad = _round_up(C_in, 8)           # sublane-aligned (f32)
    NB = _pick_nb(N, C_in, L)

    # VMEM budget gate for the fully fused path (conv result stays on-chip).
    vmem_est = 4 * (N * C_out * L_lane          # resident conv result
                    + K * C_in_pad * L_lane     # im2col scratch
                    + C_in * L_lane             # x lane-staging scratch
                    + N * C_out * L_out         # resident output block
                    + 2 * NB * C_in * L)        # double-buffered x blocks
    if vmem_est > 24 * 1024 * 1024:
        # TODO(synk): add the two-pass variant (stats-only pass + a pass that
        # recomputes the conv per tile and writes BN+ReLU directly) for shapes
        # where the conv result exceeds the v7x-safe VMEM budget.
        raise NotImplementedError("conv output too large for the fused VMEM path")

    # Fold the weight for one contraction over (k, ci); zero-pad so each
    # k-block starts at a sublane-aligned row (matches the im2col scratch).
    w_t = jnp.transpose(w, (0, 2, 1)).astype(jnp.float32)          # (C_out,K,C_in)
    w_t = jnp.pad(w_t, ((0, 0), (0, 0), (0, C_in_pad - C_in)))
    w_flat = w_t.reshape(C_out, K * C_in_pad)

    kernel = functools.partial(_fused_conv_bn_relu_kernel,
                               K=K, C_in=C_in, C_in_pad=C_in_pad, L_out=L_out)

    return pl.pallas_call(
        kernel,
        grid=(N // NB,),
        in_specs=[
            pl.BlockSpec((NB, C_in, L), lambda i: (i, 0, 0)),
            pl.BlockSpec((C_out, K * C_in_pad), lambda i: (0, 0)),
            pl.BlockSpec((C_out, 1), lambda i: (0, 0)),
            pl.BlockSpec((C_out, 1), lambda i: (0, 0)),
        ],
        out_specs=pl.BlockSpec((N, C_out, L_out), lambda i: (0, 0, 0)),
        out_shape=jax.ShapeDtypeStruct((N, C_out, L_out), x.dtype),
        scratch_shapes=[
            pltpu.VMEM((N, C_out, L_lane), jnp.float32),      # resident conv y
            pltpu.VMEM((K * C_in_pad, L_lane), jnp.float32),  # im2col RHS
            pltpu.VMEM((C_in, L_lane), jnp.float32),          # x lane staging
        ],
        compiler_params=pltpu.CompilerParams(
            dimension_semantics=("arbitrary",)),   # state carried across steps
    )(x.astype(jnp.float32), w_flat,
      gamma.reshape(C_out, 1).astype(jnp.float32),
      beta.reshape(C_out, 1).astype(jnp.float32))


def reference(x, w, gamma, beta):
    # Pure-JAX reference: Conv1d(bias=False) -> BatchNorm1d(train) -> ReLU.
    y = jax.lax.conv_general_dilated(
        x, w, window_strides=(1,), padding="VALID",
        dimension_numbers=("NCH", "OIH", "NCH"))
    mean = jnp.mean(y, axis=(0, 2), keepdims=True)
    var = jnp.mean((y - mean) ** 2, axis=(0, 2), keepdims=True)   # biased (train)
    y = (y - mean) * jax.lax.rsqrt(var + BN_EPS)
    y = y * gamma.reshape(1, -1, 1) + beta.reshape(1, -1, 1)
    return jnp.maximum(y, 0.0)


if __name__ == "__main__":
    # Small shapes consistent with the module's forward (NCL).
    N, C_in, C_out, L, K = 2, 4, 8, 16, 3

    key = jax.random.PRNGKey(0)
    kx, kw, kg, kb = jax.random.split(key, 4)
    x = jax.random.normal(kx, (N, C_in, L), dtype=jnp.float32)
    bound = 1.0 / jnp.sqrt(jnp.float32(C_in * K))
    w = jax.random.uniform(kw, (C_out, C_in, K), jnp.float32, -bound, bound)
    gamma = 1.0 + 0.1 * jax.random.normal(kg, (C_out,), jnp.float32)  # BN weight
    beta = 0.1 * jax.random.normal(kb, (C_out,), jnp.float32)         # BN bias

    out = jax.block_until_ready(basic_conv1d(x, w, gamma, beta))
    ref = jax.block_until_ready(reference(x, w, gamma, beta))

    assert out.shape == (N, C_out, L - K + 1), out.shape
    max_err = jnp.max(jnp.abs(out - ref))
    assert jnp.allclose(out, ref, atol=1e-4, rtol=1e-4), (
        f"mismatch vs reference, max abs err {max_err}")

    print("KERNEL_OK")
</pallas_src>

<mosaic_0001>
module attributes {stable_mosaic.version = 11 : i64} {
  func.func @_fused_conv_bn_relu_kernel(%arg0: i32, %arg1: memref<2x4x16xf32, #tpu.memory_space<vmem>>, %arg2: memref<8x24xf32, #tpu.memory_space<vmem>>, %arg3: memref<8x1xf32, #tpu.memory_space<vmem>>, %arg4: memref<8x1xf32, #tpu.memory_space<vmem>>, %arg5: memref<2x8x14xf32, #tpu.memory_space<vmem>>, %arg6: memref<2x8x128xf32, #tpu.memory_space<vmem>>, %arg7: memref<24x128xf32, #tpu.memory_space<vmem>>, %arg8: memref<4x128xf32, #tpu.memory_space<vmem>>) attributes {dimension_semantics = [#tpu.dimension_semantics<arbitrary>], iteration_bounds = array<i64: 1>, scalar_prefetch = 0 : i64, scratch_operands = 3 : i64, tpu.core_type = #tpu.core_type<tc>, window_params = [{transform_indices = @transform_0, window_bounds = array<i64: 2, 4, 16>}, {pipeline_mode = #tpu.pipeline_mode<synchronous>, transform_indices = @transform_1, window_bounds = array<i64: 8, 24>}, {pipeline_mode = #tpu.pipeline_mode<synchronous>, transform_indices = @transform_2, window_bounds = array<i64: 8, 1>}, {pipeline_mode = #tpu.pipeline_mode<synchronous>, transform_indices = @transform_3, window_bounds = array<i64: 8, 1>}, {pipeline_mode = #tpu.pipeline_mode<synchronous>, transform_indices = @transform_4, window_bounds = array<i64: 2, 8, 14>}]} {
    %c0_i32 = arith.constant 0 : i32
    %0 = arith.cmpi eq, %arg0, %c0_i32 : i32
    %1 = arith.extui %0 : i1 to i32
    %c0_i32_0 = arith.constant 0 : i32
    %2 = arith.cmpi ne, %1, %c0_i32_0 : i32
    scf.if %2 {
      %cst_42 = arith.constant 0.000000e+00 : f32
      %40 = vector.broadcast %cst_42 : f32 to vector<24x128xf32>
      %c0_43 = arith.constant 0 : index
      %c0_44 = arith.constant 0 : index
      %41 = vector.load %arg7[%c0_43, %c0_44] : memref<24x128xf32, #tpu.memory_space<vmem>>, vector<24x128xf32>
      tpu.vector_store %arg7[%c0_43, %c0_44], %40 {strides = array<i32>} : memref<24x128xf32, #tpu.memory_space<vmem>>, vector<24x128xf32>,
      %cst_45 = arith.constant 0.000000e+00 : f32
      %42 = vector.broadcast %cst_45 : f32 to vector<4x128xf32>
      %c0_46 = arith.constant 0 : index
      %c0_47 = arith.constant 0 : index
      %43 = vector.load %arg8[%c0_46, %c0_47] : memref<4x128xf32, #tpu.memory_space<vmem>>, vector<4x128xf32>
      tpu.vector_store %arg8[%c0_46, %c0_47], %42 {strides = array<i32>} : memref<4x128xf32, #tpu.memory_space<vmem>>, vector<4x128xf32>,
    } else {
    }
    %c0 = arith.constant 0 : index
    %c0_1 = arith.constant 0 : index
    %c0_2 = arith.constant 0 : index
    %3 = vector.load %arg1[%c0, %c0_1, %c0_2] : memref<2x4x16xf32, #tpu.memory_space<vmem>>, vector<1x4x16xf32>
    %4 = vector.shape_cast %3 : vector<1x4x16xf32> to vector<4x16xf32>
    %c0_3 = arith.constant 0 : index
    %c0_4 = arith.constant 0 : index
    %5 = vector.load %arg8[%c0_3, %c0_4] : memref<4x128xf32, #tpu.memory_space<vmem>>, vector<4x16xf32>
    tpu.vector_store %arg8[%c0_3, %c0_4], %4 {strides = array<i32>} : memref<4x128xf32, #tpu.memory_space<vmem>>, vector<4x16xf32>,
    %c0_5 = arith.constant 0 : index
    %c0_6 = arith.constant 0 : index
    %6 = vector.load %arg8[%c0_5, %c0_6] : memref<4x128xf32, #tpu.memory_space<vmem>>, vector<4x128xf32>
    %c0_7 = arith.constant 0 : index
    %c0_8 = arith.constant 0 : index
    %7 = vector.load %arg7[%c0_7, %c0_8] : memref<24x128xf32, #tpu.memory_space<vmem>>, vector<4x128xf32>
    tpu.vector_store %arg7[%c0_7, %c0_8], %6 {strides = array<i32>} : memref<24x128xf32, #tpu.memory_space<vmem>>, vector<4x128xf32>,
    %c127_i32 = arith.constant 127 : i32
    %8 = tpu.dynamic_rotate %6 by %c127_i32 dim 1 : vector<4x128xf32>, i32 -> vector<4x128xf32>
    %c8 = arith.constant 8 : index
    %c0_9 = arith.constant 0 : index
    %9 = vector.load %arg7[%c8, %c0_9] : memref<24x128xf32, #tpu.memory_space<vmem>>, vector<4x128xf32>
    tpu.vector_store %arg7[%c8, %c0_9], %8 {strides = array<i32>} : memref<24x128xf32, #tpu.memory_space<vmem>>, vector<4x128xf32>,
    %c126_i32 = arith.constant 126 : i32
    %10 = tpu.dynamic_rotate %6 by %c126_i32 dim 1 : vector<4x128xf32>, i32 -> vector<4x128xf32>
    %c16 = arith.constant 16 : index
    %c0_10 = arith.constant 0 : index
    %11 = vector.load %arg7[%c16, %c0_10] : memref<24x128xf32, #tpu.memory_space<vmem>>, vector<4x128xf32>
    tpu.vector_store %arg7[%c16, %c0_10], %10 {strides = array<i32>} : memref<24x128xf32, #tpu.memory_space<vmem>>, vector<4x128xf32>,
    %c0_11 = arith.constant 0 : index
    %c0_12 = arith.constant 0 : index
    %12 = vector.load %arg2[%c0_11, %c0_12] : memref<8x24xf32, #tpu.memory_space<vmem>>, vector<8x24xf32>
    %c0_13 = arith.constant 0 : index
    %c0_14 = arith.constant 0 : index
    %13 = vector.load %arg7[%c0_13, %c0_14] : memref<24x128xf32, #tpu.memory_space<vmem>>, vector<24x128xf32>
    %cst = arith.constant dense<0.000000e+00> : vector<8x128xf32>
    %14 = tpu.matmul %12, %13, %cst {dimension_numbers = #tpu.dot_dimension_numbers<[1], [0], [0], [1], [0, 0, 1, 1], [], []>} : vector<8x24xf32>, vector<24x128xf32>, vector<8x128xf32> -> vector<8x128xf32>
    %15 = vector.shape_cast %14 : vector<8x128xf32> to vector<1x8x128xf32>
    %c2_i32 = arith.constant 2 : i32
    %16 = arith.muli %arg0, %c2_i32 : i32
    %c0_i32_15 = arith.constant 0 : i32
    %17 = arith.addi %16, %c0_i32_15 : i32
    %18 = arith.index_cast %17 : i32 to index
    %c0_16 = arith.constant 0 : index
    %c0_17 = arith.constant 0 : index
    %19 = vector.load %arg6[%18, %c0_16, %c0_17] : memref<2x8x128xf32, #tpu.memory_space<vmem>>, vector<1x8x128xf32>
    tpu.vector_store %arg6[%18, %c0_16, %c0_17], %15 {strides = array<i32>} : memref<2x8x128xf32, #tpu.memory_space<vmem>>, vector<1x8x128xf32>,
    %c1 = arith.constant 1 : index
    %c0_18 = arith.constant 0 : index
    %c0_19 = arith.constant 0 : index
    %20 = vector.load %arg1[%c1, %c0_18, %c0_19] : memref<2x4x16xf32, #tpu.memory_space<vmem>>, vector<1x4x16xf32>
    %21 = vector.shape_cast %20 : vector<1x4x16xf32> to vector<4x16xf32>
    %c0_20 = arith.constant 0 : index
    %c0_21 = arith.constant 0 : index
    %22 = vector.load %arg8[%c0_20, %c0_21] : memref<4x128xf32, #tpu.memory_space<vmem>>, vector<4x16xf32>
    tpu.vector_store %arg8[%c0_20, %c0_21], %21 {strides = array<i32>} : memref<4x128xf32, #tpu.memory_space<vmem>>, vector<4x16xf32>,
    %c0_22 = arith.constant 0 : index
    %c0_23 = arith.constant 0 : index
    %23 = vector.load %arg8[%c0_22, %c0_23] : memref<4x128xf32, #tpu.memory_space<vmem>>, vector<4x128xf32>
    %c0_24 = arith.constant 0 : index
    %c0_25 = arith.constant 0 : index
    %24 = vector.load %arg7[%c0_24, %c0_25] : memref<24x128xf32, #tpu.memory_space<vmem>>, vector<4x128xf32>
    tpu.vector_store %arg7[%c0_24, %c0_25], %23 {strides = array<i32>} : memref<24x128xf32, #tpu.memory_space<vmem>>, vector<4x128xf32>,
    %c127_i32_26 = arith.constant 127 : i32
    %25 = tpu.dynamic_rotate %23 by %c127_i32_26 dim 1 : vector<4x128xf32>, i32 -> vector<4x128xf32>
    %c8_27 = arith.constant 8 : index
    %c0_28 = arith.constant 0 : index
    %26 = vector.load %arg7[%c8_27, %c0_28] : memref<24x128xf32, #tpu.memory_space<vmem>>, vector<4x128xf32>
    tpu.vector_store %arg7[%c8_27, %c0_28], %25 {strides = array<i32>} : memref<24x128xf32, #tpu.memory_space<vmem>>, vector<4x128xf32>,
    %c126_i32_29 = arith.constant 126 : i32
    %27 = tpu.dynamic_rotate %23 by %c126_i32_29 dim 1 : vector<4x128xf32>, i32 -> vector<4x128xf32>
    %c16_30 = arith.constant 16 : index
    %c0_31 = arith.constant 0 : index
    %28 = vector.load %arg7[%c16_30, %c0_31] : memref<24x128xf32, #tpu.memory_space<vmem>>, vector<4x128xf32>
    tpu.vector_store %arg7[%c16_30, %c0_31], %27 {strides = array<i32>} : memref<24x128xf32, #tpu.memory_space<vmem>>, vector<4x128xf32>,
    %c0_32 = arith.constant 0 : index
    %c0_33 = arith.constant 0 : index
    %29 = vector.load %arg2[%c0_32, %c0_33] : memref<8x24xf32, #tpu.memory_space<vmem>>, vector<8x24xf32>
    %c0_34 = arith.constant 0 : index
    %c0_35 = arith.constant 0 : index
    %30 = vector.load %arg7[%c0_34, %c0_35] : memref<24x128xf32, #tpu.memory_space<vmem>>, vector<24x128xf32>
    %cst_36 = arith.constant dense<0.000000e+00> : vector<8x128xf32>
    %31 = tpu.matmul %29, %30, %cst_36 {dimension_numbers = #tpu.dot_dimension_numbers<[1], [0], [0], [1], [0, 0, 1, 1], [], []>} : vector<8x24xf32>, vector<24x128xf32>, vector<8x128xf32> -> vector<8x128xf32>
    %32 = vector.shape_cast %31 : vector<8x128xf32> to vector<1x8x128xf32>
    %c2_i32_37 = arith.constant 2 : i32
    %33 = arith.muli %arg0, %c2_i32_37 : i32
    %c1_i32 = arith.constant 1 : i32
    %34 = arith.addi %33, %c1_i32 : i32
    %35 = arith.index_cast %34 : i32 to index
    %c0_38 = arith.constant 0 : index
    %c0_39 = arith.constant 0 : index
    %36 = vector.load %arg6[%35, %c0_38, %c0_39] : memref<2x8x128xf32, #tpu.memory_space<vmem>>, vector<1x8x128xf32>
    tpu.vector_store %arg6[%35, %c0_38, %c0_39], %32 {strides = array<i32>} : memref<2x8x128xf32, #tpu.memory_space<vmem>>, vector<1x8x128xf32>,
    %c0_i32_40 = arith.constant 0 : i32
    %37 = arith.cmpi eq, %arg0, %c0_i32_40 : i32
    %38 = arith.extui %37 : i1 to i32
    %c0_i32_41 = arith.constant 0 : i32
    %39 = arith.cmpi ne, %38, %c0_i32_41 : i32
    scf.if %39 {
      %c0_42 = arith.constant 0 : index
      %c0_43 = arith.constant 0 : index
      %c0_44 = arith.constant 0 : index
      %40 = vector.load %arg6[%c0_42, %c0_43, %c0_44] : memref<2x8x128xf32, #tpu.memory_space<vmem>>, vector<2x8x128xf32>
      %41 = tpu.iota {dimensions = array<i32: 2>} : vector<2x8x128xi32>
      %c14_i32 = arith.constant 14 : i32
      %42 = vector.broadcast %c14_i32 : i32 to vector<2x8x128xi32>
      %43 = arith.cmpi slt, %41, %42 : vector<2x8x128xi32>
      %cst_45 = arith.constant 0.000000e+00 : f32
      %44 = vector.broadcast %cst_45 : f32 to vector<2x8x128xf32>
      %45 = arith.select %43, %40, %44 : vector<2x8x128xi1>, vector<2x8x128xf32>
      %cst_46 = arith.constant dense<0.000000e+00> : vector<2x8xf32>
      %46 = vector.multi_reduction <add>, %45, %cst_46 [2] : vector<2x8x128xf32> to vector<2x8xf32>
      %47 = vector.shape_cast %46 : vector<2x8xf32> to vector<2x8x1xf32>
      %cst_47 = arith.constant dense<0.000000e+00> : vector<8x1xf32>
      %48 = vector.multi_reduction <add>, %47, %cst_47 [0] : vector<2x8x1xf32> to vector<8x1xf32>
      %49 = vector.shape_cast %48 : vector<8x1xf32> to vector<1x8x1xf32>
      %cst_48 = arith.constant 0.0357142873 : f32
      %50 = vector.broadcast %cst_48 : f32 to vector<1x8x1xf32>
      %51 = arith.mulf %49, %50 : vector<1x8x1xf32>
      %52 = vector.broadcast %51 : vector<1x8x1xf32> to vector<2x8x128xf32>
      %53 = arith.subf %40, %52 : vector<2x8x128xf32>
      %cst_49 = arith.constant 0.000000e+00 : f32
      %54 = vector.broadcast %cst_49 : f32 to vector<2x8x128xf32>
      %55 = arith.select %43, %53, %54 : vector<2x8x128xi1>, vector<2x8x128xf32>
      %56 = arith.mulf %55, %55 : vector<2x8x128xf32>
      %cst_50 = arith.constant dense<0.000000e+00> : vector<2x8xf32>
      %57 = vector.multi_reduction <add>, %56, %cst_50 [2] : vector<2x8x128xf32> to vector<2x8xf32>
      %58 = vector.shape_cast %57 : vector<2x8xf32> to vector<2x8x1xf32>
      %cst_51 = arith.constant dense<0.000000e+00> : vector<8x1xf32>
      %59 = vector.multi_reduction <add>, %58, %cst_51 [0] : vector<2x8x1xf32> to vector<8x1xf32>
      %60 = vector.shape_cast %59 : vector<8x1xf32> to vector<1x8x1xf32>
      %cst_52 = arith.constant 0.0357142873 : f32
      %61 = vector.broadcast %cst_52 : f32 to vector<1x8x1xf32>
      %62 = arith.mulf %60, %61 : vector<1x8x1xf32>
      %c0_53 = arith.constant 0 : index
      %c0_54 = arith.constant 0 : index
      %63 = vector.load %arg3[%c0_53, %c0_54] : memref<8x1xf32, #tpu.memory_space<vmem>>, vector<8x1xf32>
      %64 = vector.shape_cast %63 : vector<8x1xf32> to vector<1x8x1xf32>
      %cst_55 = arith.constant 9.99999974E-6 : f32
      %65 = vector.broadcast %cst_55 : f32 to vector<1x8x1xf32>
      %66 = arith.addf %62, %65 : vector<1x8x1xf32>
      %67 = math.rsqrt %66 : vector<1x8x1xf32>
      %68 = arith.mulf %64, %67 : vector<1x8x1xf32>
      %c0_56 = arith.constant 0 : index
      %c0_57 = arith.constant 0 : index
      %69 = vector.load %arg4[%c0_56, %c0_57] : memref<8x1xf32, #tpu.memory_space<vmem>>, vector<8x1xf32>
      %70 = vector.shape_cast %69 : vector<8x1xf32> to vector<1x8x1xf32>
      %71 = arith.mulf %51, %68 : vector<1x8x1xf32>
      %72 = arith.subf %70, %71 : vector<1x8x1xf32>
      %73 = vector.broadcast %68 : vector<1x8x1xf32> to vector<2x8x128xf32>
      %74 = arith.mulf %40, %73 : vector<2x8x128xf32>
      %75 = vector.broadcast %72 : vector<1x8x1xf32> to vector<2x8x128xf32>
      %76 = arith.addf %74, %75 : vector<2x8x128xf32>
      %cst_58 = arith.constant 0.000000e+00 : f32
      %77 = vector.broadcast %cst_58 : f32 to vector<2x8x128xf32>
      %78 = arith.maximumf %76, %77 : vector<2x8x128xf32>
      %79 = vector.extract_strided_slice %78 {offsets = [0, 0, 0], sizes = [2, 8, 14], strides = [1, 1, 1]} : vector<2x8x128xf32> to vector<2x8x14xf32>
      %c0_59 = arith.constant 0 : index
      %c0_60 = arith.constant 0 : index
      %c0_61 = arith.constant 0 : index
      %80 = vector.load %arg5[%c0_59, %c0_60, %c0_61] : memref<2x8x14xf32, #tpu.memory_space<vmem>>, vector<2x8x14xf32>
      tpu.vector_store %arg5[%c0_59, %c0_60, %c0_61], %79 {strides = array<i32>} : memref<2x8x14xf32, #tpu.memory_space<vmem>>, vector<2x8x14xf32>,
    } else {
    }
    return
  }
  func.func @transform_0(%arg0: i32) -> (i32, i32, i32) {
    %c0_i32 = arith.constant 0 : i32
    %c0_i32_0 = arith.constant 0 : i32
    %c0_i32_1 = arith.constant 0 : i32
    return %arg0, %c0_i32, %c0_i32_0 : i32, i32, i32
  }
  func.func @transform_1(%arg0: i32) -> (i32, i32) {
    %c0_i32 = arith.constant 0 : i32
    %c0_i32_0 = arith.constant 0 : i32
    %c0_i32_1 = arith.constant 0 : i32
    return %c0_i32, %c0_i32_0 : i32, i32
  }
  func.func @transform_2(%arg0: i32) -> (i32, i32) {
    %c0_i32 = arith.constant 0 : i32
    %c0_i32_0 = arith.constant 0 : i32
    %c0_i32_1 = arith.constant 0 : i32
    return %c0_i32, %c0_i32_0 : i32, i32
  }
  func.func @transform_3(%arg0: i32) -> (i32, i32) {
    %c0_i32 = arith.constant 0 : i32
    %c0_i32_0 = arith.constant 0 : i32
    %c0_i32_1 = arith.constant 0 : i32
    return %c0_i32, %c0_i32_0 : i32, i32
  }
  func.func @transform_4(%arg0: i32) -> (i32, i32, i32) {
    %c0_i32 = arith.constant 0 : i32
    %c0_i32_0 = arith.constant 0 : i32
    %c0_i32_1 = arith.constant 0 : i32
    %c0_i32_2 = arith.constant 0 : i32
    return %c0_i32, %c0_i32_0, %c0_i32_1 : i32, i32, i32
  }
}

</mosaic_0001>

<llo_original>
// kernel: basic_conv1d.1
$region0: #{basic_conv1d.1}
  #allocation0 [shape = 'u32[]', space=smem, size = 0x4, offset = 0x4, fixed_abs, tag = 'smem constant byte address 0x4 - core index']
  #allocation1 [shape = 'u32[72,128]{1,0:T(1,128)}', space=vmem, size = 0x9000, scoped, tag = 'internal scratch']
  #allocation2 [shape = 'f32[2,8,128]{2,1,0:T(8,128)}', space=vmem, size = 0x2000, scoped, tag = 'scratch operand']
  #allocation3 [shape = 'f32[24,128]{1,0:T(8,128)}', space=vmem, size = 0x3000, scoped, tag = 'scratch operand']
  #allocation4 [shape = 'f32[4,128]{1,0:T(4,128)}', space=vmem, size = 0x800, scoped, tag = 'scratch operand']
  %s0 = inlined_call_operand.vmem [shape: f32[2,4,16], index: 0, kind: input, shape index: {}]
  %s1 = inlined_call_operand.vmem [shape: f32[8,24], index: 1, kind: input, shape index: {}]
  %s2 = inlined_call_operand.vmem [shape: f32[8,1], index: 2, kind: input, shape index: {}]
  %s3 = inlined_call_operand.vmem [shape: f32[8,1], index: 3, kind: input, shape index: {}]
  %s4 = inlined_call_operand.hbm [shape: f32[2,8,14], index: 4, kind: output, shape index: {}]
  %s5 = sld [smem:[#allocation0]]
  $region34: #{basic_conv1d.1} parent=0
    _
  %s7 = ssub.s32 1, %s5
  %s8 = scalar_select 0, %s7, %s5
  $region1: #{basic_conv1d.1} parent=0
    #allocation5 [shape = 'u8[8192]{0}', space=vmem, size = 0x2000, scoped, tag = 'output window, operand 0, single buffered']
    #allocation6 [shape = 's32[1]{0}', space=sflag, size = 0x4, scoped, tag = 'scoped memory for basic_conv1d.1']
    %9 = vsyncpa [#allocation6], 0
    // Predicated region
    $region2: #{basic_conv1d.1} parent=1 // pred_check
      _
    $region3: #{basic_conv1d.1} parent=1 // pred_check_branch
      %11 = sbr.rel (0) target = $region5
    $region4: #{basic_conv1d.1} parent=1 // pred_region
      _
    $region5: #{basic_conv1d.1} parent=1 // pred_fallthru
      _
    // Predicated region
    $region6: #{basic_conv1d.1} parent=1 // pred_check
      _
    $region7: #{basic_conv1d.1} parent=1 // pred_check_branch
      %13 = sbr.rel (0) target = $region9
    $region8: #{basic_conv1d.1} parent=1 // pred_region
      _
    $region9: #{basic_conv1d.1} parent=1 // pred_fallthru
      _
    // Predicated region
    $region10: #{basic_conv1d.1} parent=1 // pred_check
      _
    $region11: #{basic_conv1d.1} parent=1 // pred_check_branch
      %15 = sbr.rel (0) target = $region13
    $region12: #{basic_conv1d.1} parent=1 // pred_region
      _
    $region13: #{basic_conv1d.1} parent=1 // pred_fallthru
      _
    // Predicated region
    $region14: #{basic_conv1d.1} parent=1 // pred_check
      _
    $region15: #{basic_conv1d.1} parent=1 // pred_check_branch
      %17 = sbr.rel (0) target = $region17
    $region16: #{basic_conv1d.1} parent=1 // pred_region
      _
    $region17: #{basic_conv1d.1} parent=1 // pred_fallthru
      _
    %p18 = scmp.eq.s32.totalorder 0, 0
    // Predicated region
    $region18: #{basic_conv1d.1} parent=1 // pred_check
      %p19 = pneg %p18
    $region19: #{basic_conv1d.1} parent=1 // pred_check_branch
      %21 = sbr.rel (%p19) target = $region21
    $region20: #{basic_conv1d.1} parent=1 // pred_region
      %22 = vst [vmem:[#allocation3] sm:$0xff] 0.0
      %23 = vst [vmem:[#allocation3 + $0x8] sm:$0xff] 0.0
      %24 = vst [vmem:[#allocation3 + $0x10] sm:$0xff] 0.0
      %25 = vst [vmem:[#allocation4] sm:$0xf] 0.0
    $region21: #{basic_conv1d.1} parent=1 // pred_fallthru
      _
    %v26 = vld [vmem:[%s0] sm:$0xf]
    %vm27 = vcmask 125952
    %28 = vst.msk [vmem:[#allocation4] sm:$0xf] %vm27, %v26
    %v29 = vld [vmem:[#allocation4] sm:$0xf]
    %30 = vst [vmem:[#allocation3] sm:$0xf] %v29
    %31 = vrot.lane.b32.xlu0 %v29, 127
    %v32 = vpop.permute.xlu0 %31
    %33 = vst [vmem:[#allocation3 + $0x8] sm:$0xf] %v32
    %34 = vrot.lane.b32.xlu0 %v29, 126
    %v35 = vpop.permute.xlu0 %34
    %36 = vst [vmem:[#allocation3 + $0x10] sm:$0xf] %v35
    %v37 = vld [vmem:[%s1] sm:$0xff]
    %v38 = vld [vmem:[#allocation3] sm:$0xff]
    %v39 = vld [vmem:[#allocation3 + $0x8] sm:$0xff]
    %v40 = vld [vmem:[#allocation3 + $0x10] sm:$0xff]
    %vm41 = vcmask 195584
    %v43 = vsel %vm41, %v37, 0
    %45 = vmatpush.msra.mxu0 0.0
    %46 = vmatpush.msra.mxu0 0.0
    %47 = vmatpush.msra.mxu0 0.0
    %48 = vmatpush.msra.mxu0 0.0
    %49 = vmatpush.msra.mxu0 0.0
    %50 = vmatpush.msra.mxu0 0.0
    %51 = vmatpush.msra.mxu0 0.0
    %52 = vmatpush.msra.mxu0 0.0
    %53 = vmatpush.msra.mxu0 0.0
    %54 = vmatpush.msra.mxu0 0.0
    %55 = vmatpush.msra.mxu0 0.0
    %56 = vmatpush.msra.mxu0 0.0
    %57 = vmatpush.msra.mxu0 0.0
    %58 = vmatpush.msra.mxu0 %v40
    %59 = vmatpush.msra.mxu0 %v39
    %60 = vmatpush.msra.mxu0 %v38
    %61 = vmatmul.f32.gmra.mxu0 %v43
    %v62 = vpop.f32.mrf.mxu0
    %v63 = vadd.f32 0.0, %v62
    %64 = vdwg.mxu0
    %s65 = smul.u32 0, 2
    %s66 = smul.u32 %s65, 8
    %s67 = scalar_lea.vmem [#allocation2], %s66
    %68 = vst [vmem:[%s67] sm:$0xff] %v63
    %s69 = scalar_lea.vmem %s0, 4
    %v70 = vld [vmem:[%s69] sm:$0xf]
    %71 = vst.msk [vmem:[#allocation4] sm:$0xf] %vm27, %v70
    %v72 = vld [vmem:[#allocation4] sm:$0xf]
    %73 = vst [vmem:[#allocation3] sm:$0xf] %v72
    %74 = vrot.lane.b32.xlu0 %v72, 127
    %v75 = vpop.permute.xlu0 %74
    %76 = vst [vmem:[#allocation3 + $0x8] sm:$0xf] %v75
    %77 = vrot.lane.b32.xlu0 %v72, 126
    %v78 = vpop.permute.xlu0 %77
    %79 = vst [vmem:[#allocation3 + $0x10] sm:$0xf] %v78
    %v80 = vld [vmem:[%s1] sm:$0xff]
    %v81 = vld [vmem:[#allocation3] sm:$0xff]
    %v82 = vld [vmem:[#allocation3 + $0x8] sm:$0xff]
    %v83 = vld [vmem:[#allocation3 + $0x10] sm:$0xff]
    %v85 = vsel %vm41, %v80, 0
    %87 = vmatpush.msra.mxu0 0.0
    %88 = vmatpush.msra.mxu0 0.0
    %89 = vmatpush.msra.mxu0 0.0
    %90 = vmatpush.msra.mxu0 0.0
    %91 = vmatpush.msra.mxu0 0.0
    %92 = vmatpush.msra.mxu0 0.0
    %93 = vmatpush.msra.mxu0 0.0
    %94 = vmatpush.msra.mxu0 0.0
    %95 = vmatpush.msra.mxu0 0.0
    %96 = vmatpush.msra.mxu0 0.0
    %97 = vmatpush.msra.mxu0 0.0
    %98 = vmatpush.msra.mxu0 0.0
    %99 = vmatpush.msra.mxu0 0.0
    %100 = vmatpush.msra.mxu0 %v83
    %101 = vmatpush.msra.mxu0 %v82
    %102 = vmatpush.msra.mxu0 %v81
    %103 = vmatmul.f32.gmra.mxu0 %v85
    %v104 = vpop.f32.mrf.mxu0
    %v105 = vadd.f32 0.0, %v104
    %106 = vdwg.mxu0
    %s107 = sadd.s32 %s65, 1
    %s108 = smul.u32 %s107, 8
    %s109 = scalar_lea.vmem [#allocation2], %s108
    %110 = vst [vmem:[%s109] sm:$0xff] %v105
    // Predicated region
    $region22: #{basic_conv1d.1} parent=1 // pred_check
      %p111 = pneg %p18
    $region23: #{basic_conv1d.1} parent=1 // pred_check_branch
      %113 = sbr.rel (%p111) target = $region25
    $region24: #{basic_conv1d.1} parent=1 // pred_region
      %v114 = vld [vmem:[#allocation2] sm:$0xff]
      %v115 = vld [vmem:[#allocation2 + $0x8] sm:$0xff]
      %v116 = vlaneseq
      %v117 = vand.u32 %v116, 127
      %vm118 = vcmp.lt.s32.totalorder %v117, 14
      %v119 = vsel %vm118, %v114, 0.0
      %v120 = vsel %vm118, %v115, 0.0
      %121 = vadd.xlane.f32.xlu0 %v119
      %v122 = vpop.xlane.xlu0 %121
      %123 = vadd.xlane.f32.xlu0 %v120
      %v124 = vpop.xlane.xlu0 %123
      %v125 = vadd.f32 %v122, %v124
      %v126 = vmul.f32 %v125, 0.035714287
      %v127 = vsub.f32 %v114, %v126
      %v128 = vsub.f32 %v115, %v126
      %v129 = vsel %vm118, %v127, 0.0
      %v130 = vsel %vm118, %v128, 0.0
      %v131 = vmul.f32 %v129, %v129
      %v132 = vmul.f32 %v130, %v130
      %133 = vadd.xlane.f32.xlu0 %v131
      %v134 = vpop.xlane.xlu0 %133
      %135 = vadd.xlane.f32.xlu0 %v132
      %v136 = vpop.xlane.xlu0 %135
      %v137 = vadd.f32 %v134, %v136
      %v138 = vmul.f32 %v137, 0.035714287
      %v139 = vld [vmem:[%s2] sm:$0xff]
      %v140 = vadd.f32 %v138, 1e-05
      %v141 = vrsqrt.pop %v140
      %v142 = vmul.f32 %v141, %v140
      %v143 = vmul.f32 %v142, %v141
      %v144 = vmul.f32 0.5, %v143
      %v145 = vsub.f32 1.5, %v144
      %v146 = vmul.f32 %v141, %v145
      %vm147 = vweird.f32 %v140
      %vm148 = vweird.f32 %v141
      %vm149 = vmor %vm147, %vm148
      %v150 = vsel %vm149, %v141, %v146
      %v151 = vmul.f32 %v139, %v150
      %v152 = vld [vmem:[%s3] sm:$0xff]
      %v153 = vmul.f32 %v126, %v151
      %v154 = vsub.f32 %v152, %v153
      %156 = vset.pattern.permute.xlu0 0
      %157 = vperm.xlu0 %156, %v151
      %v158 = vpop.permute.xlu0 %157
      %v160 = vmul.f32 %v114, %v158
      %v161 = vmul.f32 %v115, %v158
      %163 = vset.pattern.permute.xlu0 0
      %164 = vperm.xlu0 %163, %v154
      %v165 = vpop.permute.xlu0 %164
      %v167 = vadd.f32 %v160, %v165
      %v168 = vadd.f32 %v161, %v165
      %v169 = vmax.f32 %v167, 0.0
      %v170 = vmax.f32 %v168, 0.0
      %vm171 = vcmask 113664
      %172 = vst.msk [vmem:[#allocation5] sm:$0xff] %vm171, %v169
      %173 = vst.msk [vmem:[#allocation5 + $0x8] sm:$0xff] %vm171, %v170
    $region25: #{basic_conv1d.1} parent=1 // pred_fallthru
      _
    // Predicated region
    $region26: #{basic_conv1d.1} parent=1 // pred_check
      _
    $region27: #{basic_conv1d.1} parent=1 // pred_check_branch
      %175 = sbr.rel (0) target = $region29
    $region28: #{basic_conv1d.1} parent=1 // pred_region
      %177 = vsyncadd [#allocation6], 0
      %s178 = sshll.u32 [#allocation5], 4
      %s179 = int_to_ptr.vmem [resolvable:$true] %s178
      %s180 = sshll.u32 %s4, 4
      %s181 = int_to_ptr.hbm [resolvable:$true] %s180
      %186 = dma.vmem_to_hbm [thread:$0]  %s179, 256, %s181, [#allocation6], 128, 128, 8
    $region29: #{basic_conv1d.1} parent=1 // pred_fallthru
      _
    // Predicated region
    $region30: #{basic_conv1d.1} parent=1 // pred_check
      _
    $region31: #{basic_conv1d.1} parent=1 // pred_check_branch
      %188 = sbr.rel (0) target = $region33
    $region32: #{basic_conv1d.1} parent=1 // pred_region
      %190 = dma.done [#allocation6], 256
    $region33: #{basic_conv1d.1} parent=1 // pred_fallthru
      _
    %191 = vsyncpa [#allocation6], 1

</llo_original>
